<compile_context>
chip_gen: v6e
topology: v6e:2x2x1
jax: 0.10.0
libtpu: 0.0.40
codegen_flags: <defaults>
</compile_context>

<pallas_src>
import functools

import jax
import jax.numpy as jnp
from jax.experimental import pallas as pl
from jax.experimental.pallas import tpu as pltpu


def _round_up(n, m):
    return (n + m - 1) // m * m


# ---------------------------------------------------------------------------
# Pass 1: full-batch BatchNorm statistics, single fused pass over x.
# Grid iterates over batch tiles ("arbitrary"); the (1, Hp) outputs act as
# resident accumulators across the grid and are finalized on the last step.
# Padded (zero) rows contribute nothing to the sums; we divide by the true N.
# ---------------------------------------------------------------------------
def bn_stats_kernel(x_ref, mean_ref, rstd_ref, *, n_rows, eps):
    k = pl.program_id(0)

    @pl.when(k == 0)
    def _():
        mean_ref[...] = jnp.zeros_like(mean_ref)
        rstd_ref[...] = jnp.zeros_like(rstd_ref)

    x = x_ref[...].astype(jnp.float32)                 # (tm, Hp)
    # One pass over x: accumulate sum(x) and sum(x*x) together.
    mean_ref[...] += jnp.sum(x, axis=0, keepdims=True)
    rstd_ref[...] += jnp.sum(x * x, axis=0, keepdims=True)

    @pl.when(k == pl.num_programs(0) - 1)
    def _():
        inv_n = 1.0 / n_rows
        s = mean_ref[...]
        ss = rstd_ref[...]
        mean = s * inv_n
        var = ss * inv_n - mean * mean                 # biased variance (train mode)
        mean_ref[...] = mean
        rstd_ref[...] = jax.lax.rsqrt(var + eps)


# ---------------------------------------------------------------------------
# Pass 2: fused BN-apply -> fc1 -> ReLU -> fc2 -> residual, tiled over batch.
# ---------------------------------------------------------------------------
def block_fwd_kernel(x_ref, mean_ref, rstd_ref, gamma_ref, beta_ref,
                     w1_ref, b1_ref, w2_ref, b2_ref, o_ref):
    x = x_ref[...].astype(jnp.float32)                 # (tm, Hp)

    # BatchNorm1d apply (f32 elementwise): gamma * xhat + beta.
    out = (x - mean_ref[...]) * rstd_ref[...] * gamma_ref[...] + beta_ref[...]

    # fc1 + ReLU: bf16 operands on the MXU, f32 accumulation.
    h = jnp.dot(out.astype(jnp.bfloat16), w1_ref[...],
                preferred_element_type=jnp.float32) + b1_ref[...]
    h = jnp.maximum(h, 0.0)

    # fc2: bf16 operands on the MXU, f32 accumulation.
    y = jnp.dot(h.astype(jnp.bfloat16), w2_ref[...],
                preferred_element_type=jnp.float32) + b2_ref[...]

    # Residual add in f32, cast once for the store.
    o_ref[...] = (y + x).astype(o_ref.dtype)


def block_with_skip_bn(x, gamma, beta, w1, b1, w2, b2, *, tile_m=32, eps=1e-5):
    """x: (N, H); gamma/beta/b2: (1, H); w1: (H, 4H); b1: (1, 4H); w2: (4H, H)."""
    N, H = x.shape
    H4 = w1.shape[1]

    # Lane-dense (multiple-of-128) feature dims, sublane-aligned batch tiles.
    Hp = _round_up(H, 128)
    H4p = _round_up(H4, 128)
    tm = _round_up(min(tile_m, _round_up(N, 8)), 8)
    Np = _round_up(N, tm)

    f32 = jnp.float32
    xp = jnp.pad(x.astype(f32), ((0, Np - N), (0, Hp - H)))
    gp = jnp.pad(gamma.astype(f32), ((0, 0), (0, Hp - H)))
    bp = jnp.pad(beta.astype(f32), ((0, 0), (0, Hp - H)))
    w1p = jnp.pad(w1.astype(f32), ((0, Hp - H), (0, H4p - H4))).astype(jnp.bfloat16)
    b1p = jnp.pad(b1.astype(f32), ((0, 0), (0, H4p - H4)))
    w2p = jnp.pad(w2.astype(f32), ((0, H4p - H4), (0, Hp - H))).astype(jnp.bfloat16)
    b2p = jnp.pad(b2.astype(f32), ((0, 0), (0, Hp - H)))

    grid = (Np // tm,)
    vmem_limit = 48 * 1024 * 1024   # fits v7x's 64 MiB VMEM with headroom

    # ---- Pass 1: batch mean / rsqrt(var + eps) over the FULL batch ----------
    mean, rstd = pl.pallas_call(
        functools.partial(bn_stats_kernel, n_rows=float(N), eps=eps),
        out_shape=(jax.ShapeDtypeStruct((1, Hp), jnp.float32),
                   jax.ShapeDtypeStruct((1, Hp), jnp.float32)),
        grid=grid,
        in_specs=[pl.BlockSpec((tm, Hp), lambda i: (i, 0))],
        out_specs=(pl.BlockSpec((1, Hp), lambda i: (0, 0)),
                   pl.BlockSpec((1, Hp), lambda i: (0, 0))),
        compiler_params=pltpu.CompilerParams(
            dimension_semantics=("arbitrary",),      # accumulator across tiles
            vmem_limit_bytes=vmem_limit),
    )(xp)

    # ---- Pass 2: fused block, batch-tiled and parallel across TCs -----------
    out_p = pl.pallas_call(
        block_fwd_kernel,
        out_shape=jax.ShapeDtypeStruct((Np, Hp), x.dtype),
        grid=grid,
        in_specs=[
            pl.BlockSpec((tm, Hp), lambda i: (i, 0)),    # x tile
            pl.BlockSpec((1, Hp), lambda i: (0, 0)),     # mean
            pl.BlockSpec((1, Hp), lambda i: (0, 0)),     # rstd
            pl.BlockSpec((1, Hp), lambda i: (0, 0)),     # gamma
            pl.BlockSpec((1, Hp), lambda i: (0, 0)),     # beta
            pl.BlockSpec((Hp, H4p), lambda i: (0, 0)),   # w1 (bf16)
            pl.BlockSpec((1, H4p), lambda i: (0, 0)),    # b1
            pl.BlockSpec((H4p, Hp), lambda i: (0, 0)),   # w2 (bf16)
            pl.BlockSpec((1, Hp), lambda i: (0, 0)),     # b2
        ],
        out_specs=pl.BlockSpec((tm, Hp), lambda i: (i, 0)),
        compiler_params=pltpu.CompilerParams(
            dimension_semantics=("parallel",),           # batch tiles independent
            vmem_limit_bytes=vmem_limit),
    )(xp, mean, rstd, gp, bp, w1p, b1p, w2p, b2p)

    return out_p[:N, :H]


# ---------------------------------------------------------------------------
# Pure-JAX references.
# ---------------------------------------------------------------------------
def reference_bf16(x, gamma, beta, w1, b1, w2, b2, eps=1e-5):
    """Matches the kernel numerics (fused stats, bf16 matmul operands, f32 acc)."""
    mean = jnp.mean(x, axis=0, keepdims=True)
    var = jnp.mean(x * x, axis=0, keepdims=True) - mean * mean
    out = (x - mean) * jax.lax.rsqrt(var + eps) * gamma + beta
    h = jnp.dot(out.astype(jnp.bfloat16), w1.astype(jnp.bfloat16),
                preferred_element_type=jnp.float32) + b1
    h = jnp.maximum(h, 0.0)
    y = jnp.dot(h.astype(jnp.bfloat16), w2.astype(jnp.bfloat16),
                preferred_element_type=jnp.float32) + b2
    return y + x


def reference_f32(x, gamma, beta, w1, b1, w2, b2, eps=1e-5):
    """Straight f32 port of the PyTorch module (train-mode BN forward)."""
    mean = jnp.mean(x, axis=0, keepdims=True)
    var = jnp.mean((x - mean) ** 2, axis=0, keepdims=True)
    out = (x - mean) / jnp.sqrt(var + eps) * gamma + beta
    h = jnp.maximum(out @ w1 + b1, 0.0)
    return h @ w2 + b2 + x


if __name__ == "__main__":
    N, H = 64, 32          # small shapes; N=64 exercises multi-tile grid (tm=32)
    H4 = 4 * H

    key = jax.random.PRNGKey(0)
    kx, kg, kb, kw1, kb1, kw2, kb2 = jax.random.split(key, 7)

    x = jax.random.normal(kx, (N, H), dtype=jnp.float32)

    # Deterministic parameter init (shapes implied by the module __init__).
    gamma = 1.0 + 0.1 * jax.random.normal(kg, (1, H), dtype=jnp.float32)
    beta = 0.1 * jax.random.normal(kb, (1, H), dtype=jnp.float32)
    w1 = jax.random.normal(kw1, (H, H4), dtype=jnp.float32) * (1.0 / jnp.sqrt(H))
    b1 = jax.random.normal(kb1, (1, H4), dtype=jnp.float32) * (1.0 / jnp.sqrt(H))
    w2 = jax.random.normal(kw2, (H4, H), dtype=jnp.float32) * (1.0 / jnp.sqrt(H4))
    b2 = jax.random.normal(kb2, (1, H), dtype=jnp.float32) * (1.0 / jnp.sqrt(H4))

    out = block_with_skip_bn(x, gamma, beta, w1, b1, w2, b2)
    out = jax.block_until_ready(out)
    assert out.shape == (N, H)

    # Tight check vs. a reference with identical bf16-matmul numerics.
    ref_b = reference_bf16(x, gamma, beta, w1, b1, w2, b2)
    assert jnp.allclose(out, ref_b, atol=1e-4, rtol=1e-4), \
        "mismatch vs. bf16-matmul reference"

    # Loose sanity check vs. the full-f32 PyTorch-equivalent forward.
    ref_f = reference_f32(x, gamma, beta, w1, b1, w2, b2)
    assert jnp.allclose(out, ref_f, atol=1e-1, rtol=1e-1), \
        "mismatch vs. f32 reference beyond bf16 tolerance"

    print("KERNEL_OK")
</pallas_src>

<mosaic_0001>
module attributes {stable_mosaic.version = 11 : i64} {
  func.func @bn_stats_kernel(%arg0: i32, %arg1: memref<32x128xf32, #tpu.memory_space<vmem>>, %arg2: memref<1x128xf32, #tpu.memory_space<vmem>>, %arg3: memref<1x128xf32, #tpu.memory_space<vmem>>) attributes {dimension_semantics = [#tpu.dimension_semantics<arbitrary>], iteration_bounds = array<i64: 2>, scalar_prefetch = 0 : i64, scratch_operands = 0 : i64, tpu.core_type = #tpu.core_type<tc>, window_params = [{transform_indices = @transform_0, window_bounds = array<i64: 32, 128>}, {pipeline_mode = #tpu.pipeline_mode<synchronous>, transform_indices = @transform_1, window_bounds = array<i64: 1, 128>}, {pipeline_mode = #tpu.pipeline_mode<synchronous>, transform_indices = @transform_2, window_bounds = array<i64: 1, 128>}]} {
    %c0_i32 = arith.constant 0 : i32
    %0 = arith.cmpi eq, %arg0, %c0_i32 : i32
    %1 = arith.extui %0 : i1 to i32
    %c0_i32_0 = arith.constant 0 : i32
    %2 = arith.cmpi ne, %1, %c0_i32_0 : i32
    scf.if %2 {
      %cst_12 = arith.constant 0.000000e+00 : f32
      %18 = vector.broadcast %cst_12 : f32 to vector<1x128xf32>
      %c0_13 = arith.constant 0 : index
      %c0_14 = arith.constant 0 : index
      %19 = vector.load %arg2[%c0_13, %c0_14] : memref<1x128xf32, #tpu.memory_space<vmem>>, vector<1x128xf32>
      tpu.vector_store %arg2[%c0_13, %c0_14], %18 {strides = array<i32>} : memref<1x128xf32, #tpu.memory_space<vmem>>, vector<1x128xf32>,
      %cst_15 = arith.constant 0.000000e+00 : f32
      %20 = vector.broadcast %cst_15 : f32 to vector<1x128xf32>
      %c0_16 = arith.constant 0 : index
      %c0_17 = arith.constant 0 : index
      %21 = vector.load %arg3[%c0_16, %c0_17] : memref<1x128xf32, #tpu.memory_space<vmem>>, vector<1x128xf32>
      tpu.vector_store %arg3[%c0_16, %c0_17], %20 {strides = array<i32>} : memref<1x128xf32, #tpu.memory_space<vmem>>, vector<1x128xf32>,
    } else {
    }
    %c0 = arith.constant 0 : index
    %c0_1 = arith.constant 0 : index
    %3 = vector.load %arg1[%c0, %c0_1] : memref<32x128xf32, #tpu.memory_space<vmem>>, vector<32x128xf32>
    %c0_2 = arith.constant 0 : index
    %c0_3 = arith.constant 0 : index
    %4 = vector.load %arg2[%c0_2, %c0_3] : memref<1x128xf32, #tpu.memory_space<vmem>>, vector<1x128xf32>
    %cst = arith.constant dense<0.000000e+00> : vector<128xf32>
    %5 = vector.multi_reduction <add>, %3, %cst [0] : vector<32x128xf32> to vector<128xf32>
    %6 = vector.shape_cast %5 : vector<128xf32> to vector<1x128xf32>
    %7 = arith.addf %4, %6 : vector<1x128xf32>
    %c0_4 = arith.constant 0 : index
    %c0_5 = arith.constant 0 : index
    %8 = vector.load %arg2[%c0_4, %c0_5] : memref<1x128xf32, #tpu.memory_space<vmem>>, vector<1x128xf32>
    tpu.vector_store %arg2[%c0_4, %c0_5], %7 {strides = array<i32>} : memref<1x128xf32, #tpu.memory_space<vmem>>, vector<1x128xf32>,
    %c0_6 = arith.constant 0 : index
    %c0_7 = arith.constant 0 : index
    %9 = vector.load %arg3[%c0_6, %c0_7] : memref<1x128xf32, #tpu.memory_space<vmem>>, vector<1x128xf32>
    %10 = arith.mulf %3, %3 : vector<32x128xf32>
    %cst_8 = arith.constant dense<0.000000e+00> : vector<128xf32>
    %11 = vector.multi_reduction <add>, %10, %cst_8 [0] : vector<32x128xf32> to vector<128xf32>
    %12 = vector.shape_cast %11 : vector<128xf32> to vector<1x128xf32>
    %13 = arith.addf %9, %12 : vector<1x128xf32>
    %c0_9 = arith.constant 0 : index
    %c0_10 = arith.constant 0 : index
    %14 = vector.load %arg3[%c0_9, %c0_10] : memref<1x128xf32, #tpu.memory_space<vmem>>, vector<1x128xf32>
    tpu.vector_store %arg3[%c0_9, %c0_10], %13 {strides = array<i32>} : memref<1x128xf32, #tpu.memory_space<vmem>>, vector<1x128xf32>,
    %c1_i32 = arith.constant 1 : i32
    %15 = arith.cmpi eq, %arg0, %c1_i32 : i32
    %16 = arith.extui %15 : i1 to i32
    %c0_i32_11 = arith.constant 0 : i32
    %17 = arith.cmpi ne, %16, %c0_i32_11 : i32
    scf.if %17 {
      %c0_12 = arith.constant 0 : index
      %c0_13 = arith.constant 0 : index
      %18 = vector.load %arg2[%c0_12, %c0_13] : memref<1x128xf32, #tpu.memory_space<vmem>>, vector<1x128xf32>
      %c0_14 = arith.constant 0 : index
      %c0_15 = arith.constant 0 : index
      %19 = vector.load %arg3[%c0_14, %c0_15] : memref<1x128xf32, #tpu.memory_space<vmem>>, vector<1x128xf32>
      %cst_16 = arith.constant 1.562500e-02 : f32
      %20 = vector.broadcast %cst_16 : f32 to vector<1x128xf32>
      %21 = arith.mulf %18, %20 : vector<1x128xf32>
      %cst_17 = arith.constant 1.562500e-02 : f32
      %22 = vector.broadcast %cst_17 : f32 to vector<1x128xf32>
      %23 = arith.mulf %19, %22 : vector<1x128xf32>
      %24 = arith.mulf %21, %21 : vector<1x128xf32>
      %25 = arith.subf %23, %24 : vector<1x128xf32>
      %c0_18 = arith.constant 0 : index
      %c0_19 = arith.constant 0 : index
      %26 = vector.load %arg2[%c0_18, %c0_19] : memref<1x128xf32, #tpu.memory_space<vmem>>, vector<1x128xf32>
      tpu.vector_store %arg2[%c0_18, %c0_19], %21 {strides = array<i32>} : memref<1x128xf32, #tpu.memory_space<vmem>>, vector<1x128xf32>,
      %cst_20 = arith.constant 9.99999974E-6 : f32
      %27 = vector.broadcast %cst_20 : f32 to vector<1x128xf32>
      %28 = arith.addf %25, %27 : vector<1x128xf32>
      %29 = math.rsqrt %28 : vector<1x128xf32>
      %c0_21 = arith.constant 0 : index
      %c0_22 = arith.constant 0 : index
      %30 = vector.load %arg3[%c0_21, %c0_22] : memref<1x128xf32, #tpu.memory_space<vmem>>, vector<1x128xf32>
      tpu.vector_store %arg3[%c0_21, %c0_22], %29 {strides = array<i32>} : memref<1x128xf32, #tpu.memory_space<vmem>>, vector<1x128xf32>,
    } else {
    }
    return
  }
  func.func @transform_0(%arg0: i32) -> (i32, i32) {
    %c0_i32 = arith.constant 0 : i32
    %c0_i32_0 = arith.constant 0 : i32
    return %arg0, %c0_i32 : i32, i32
  }
  func.func @transform_1(%arg0: i32) -> (i32, i32) {
    %c0_i32 = arith.constant 0 : i32
    %c0_i32_0 = arith.constant 0 : i32
    %c0_i32_1 = arith.constant 0 : i32
    return %c0_i32, %c0_i32_0 : i32, i32
  }
  func.func @transform_2(%arg0: i32) -> (i32, i32) {
    %c0_i32 = arith.constant 0 : i32
    %c0_i32_0 = arith.constant 0 : i32
    %c0_i32_1 = arith.constant 0 : i32
    return %c0_i32, %c0_i32_0 : i32, i32
  }
}

</mosaic_0001>

<llo_original>
// kernel: tpu_custom_call.1
$region0: #{tpu_custom_call.1}
  #allocation0 [shape = 'u32[]', space=smem, size = 0x4, offset = 0x4, fixed_abs, tag = 'smem constant byte address 0x4 - core index']
  #allocation1 [shape = 'u32[144,128]{1,0:T(1,128)}', space=vmem, size = 0x12000, scoped, tag = 'internal scratch']
  %s0 = inlined_call_operand.hbm [shape: f32[64,128], index: 0, kind: input, shape index: {}]
  %s1 = inlined_call_operand.hbm [shape: f32[1,128], index: 1, kind: output, shape index: {0}]
  %s2 = inlined_call_operand.hbm [shape: f32[1,128], index: 2, kind: output, shape index: {1}]
  %3 = xla_tuple %s1, %s2
  %s4 = sld [smem:[#allocation0]]
  $region57: #{tpu_custom_call.1} parent=0
    _
  %s6 = ssub.s32 1, %s4
  %s7 = scalar_select 0, %s6, %s4
  $region1: #{tpu_custom_call.1} parent=0
    #allocation2 [shape = 'u8[32768]{0}', space=vmem, size = 0x8000, scoped, tag = 'input window, operand 0']
    #allocation3 [shape = 's32[2]{0}', space=sflag, size = 0x8, scoped, tag = 'scoped memory for tpu_custom_call.1']
    #allocation4 [shape = 's32[2]{0}', space=sflag, size = 0x8, scoped, tag = 'scoped memory for tpu_custom_call.1']
    #allocation5 [shape = 'u8[512]{0}', space=vmem, size = 0x400, scoped, tag = 'output window, operand 0, single buffered']
    #allocation6 [shape = 'u8[512]{0}', space=vmem, size = 0x400, scoped, tag = 'output window, operand 1, single buffered']
    #allocation7 [shape = 's32[1]{0}', space=sflag, size = 0x4, scoped, tag = 'scoped memory for tpu_custom_call.1']
    %8 = vsyncpa [#allocation3], 0
    %s9 = scalar_lea.sflag [#allocation3], 1
    %10 = vsyncpa %s9, 0
    %11 = vsyncpa [#allocation4], 0
    %12 = vsyncpa [#allocation7], 0
    loop: start=0, step=1, limit=4
    $region2: #{tpu_custom_call.1} parent=1 // loop_pre_header
      _
    $region3: #{tpu_custom_call.1} parent=1 // loop_header
      %s14 = sphi 0, %s18
      %p15 = scmp.ge.s32.totalorder %s14, 4
      %s24 = sphi 0, %s26
      %s27 = sphi 0, %s24
      %s28 = sphi 0, %s27
      %s44 = sphi 0, %s28
      %s48 = sphi 0, %s48
      %s50 = sphi 0, %s48
      %s51 = sphi 0, %s50
      %s65 = sphi 0, %s51
      %s69 = sphi 0, %s69
      %s71 = sphi 0, %s69
      %s72 = sphi 0, %s71
      %s86 = sphi 0, %s72
    $region4: #{tpu_custom_call.1} parent=1 // loop_header_branch
      %17 = sbr.rel (%p15) target = $region8
    $region5: #{tpu_custom_call.1} parent=1 // loop_body
      %s19 = ssub.s32 %s14, 1
      %s20 = ssub.s32 %s14, 2
      %s21 = sadd.s32 %s14, 1
      %s22 = ssub.s32 %s14, %s21
      %p23 = scmp.eq.s32.totalorder %s22, 0
      %s25 = sadd.s32 %s24, 1
      %s26 = scalar_select %p23, %s24, %s25
      %p29 = pneg %p23
      %p30 = scmp.eq.s32.totalorder %s14, 1
      %p31 = por %p29, %p30
      %p32 = scmp.ne.s32.totalorder %s24, %s27
      %p33 = scmp.eq.s32.totalorder %s14, 0
      %p34 = por %p32, %p33
      %p35 = scmp.ne.s32.totalorder %s24, %s27
      %p36 = scmp.eq.s32.totalorder %s19, 1
      %p37 = por %p35, %p36
      %p38 = scmp.ne.s32.totalorder %s27, %s28
      %p39 = scmp.eq.s32.totalorder %s19, 0
      %p40 = por %p38, %p39
      %p41 = scmp.ne.s32.totalorder %s27, %s28
      %p42 = scmp.eq.s32.totalorder %s20, 1
      %p43 = por %p41, %p42
      %p45 = scmp.ne.s32.totalorder %s28, %s44
      %p46 = scmp.eq.s32.totalorder %s20, 0
      %p47 = por %p45, %p46
      %s49 = sadd.s32 %s48, 1
      %p52 = scmp.eq.s32.totalorder %s14, 1
      %p53 = scmp.ne.s32.totalorder %s48, %s50
      %p54 = scmp.eq.s32.totalorder %s14, 0
      %p55 = por %p53, %p54
      %p56 = scmp.ne.s32.totalorder %s48, %s50
      %p57 = scmp.eq.s32.totalorder %s19, 1
      %p58 = por %p56, %p57
      %p59 = scmp.ne.s32.totalorder %s50, %s51
      %p60 = scmp.eq.s32.totalorder %s19, 0
      %p61 = por %p59, %p60
      %p62 = scmp.ne.s32.totalorder %s50, %s51
      %p63 = scmp.eq.s32.totalorder %s20, 1
      %p64 = por %p62, %p63
      %p66 = scmp.ne.s32.totalorder %s51, %s65
      %p67 = scmp.eq.s32.totalorder %s20, 0
      %p68 = por %p66, %p67
      %s70 = sadd.s32 %s69, 1
      %p73 = scmp.eq.s32.totalorder %s14, 1
      %p74 = scmp.ne.s32.totalorder %s69, %s71
      %p75 = scmp.eq.s32.totalorder %s14, 0
      %p76 = por %p74, %p75
      %p77 = scmp.ne.s32.totalorder %s69, %s71
      %p78 = scmp.eq.s32.totalorder %s19, 1
      %p79 = por %p77, %p78
      %p80 = scmp.ne.s32.totalorder %s71, %s72
      %p81 = scmp.eq.s32.totalorder %s19, 0
      %p82 = por %p80, %p81
      %p83 = scmp.ne.s32.totalorder %s71, %s72
      %p84 = scmp.eq.s32.totalorder %s20, 1
      %p85 = por %p83, %p84
      %p87 = scmp.ne.s32.totalorder %s72, %s86
      %p88 = scmp.eq.s32.totalorder %s20, 0
      %p89 = por %p87, %p88
      %p90 = scmp.le.s32.totalorder 1, %s14
      %p91 = scmp.lt.s32.totalorder %s14, 3
      %p92 = pnand %p90, %p91
      %p93 = pneg %p92
      // Predicated region
      $region9: #{tpu_custom_call.1} parent=5 // pred_check
        _
      $region10: #{tpu_custom_call.1} parent=5 // pred_check_branch
        %95 = sbr.rel (%p92) target = $region12
      $region11: #{tpu_custom_call.1} parent=5 // pred_region
        %s96 = ssub.s32 %s14, 1
      $region12: #{tpu_custom_call.1} parent=5 // pred_fallthru
        _
      %p97 = scmp.lt.s32.totalorder %s14, 2
      // Predicated region
      $region13: #{tpu_custom_call.1} parent=5 // pred_check
        %p98 = pneg %p97
      $region14: #{tpu_custom_call.1} parent=5 // pred_check_branch
        %100 = sbr.rel (%p98) target = $region16
      $region15: #{tpu_custom_call.1} parent=5 // pred_region
        // Predicated region
        $region17: #{tpu_custom_call.1} parent=15 // pred_check
          %p101 = pneg %p34
        $region18: #{tpu_custom_call.1} parent=15 // pred_check_branch
          %103 = sbr.rel (%p101) target = $region20
        $region19: #{tpu_custom_call.1} parent=15 // pred_region
          %s104 = sand.u32 %s24, 1
          %s105 = scalar_lea.sflag [#allocation3], %s104
          %s106 = sand.u32 %s24, 1
          %s107 = smul.addr %s106, 32
          %s108 = scalar_lea.vmem [#allocation2], %s107
          %s109 = smul.u32 4, %s14
          %s111 = ssub.s32 512, 512
          %112 = vsyncadd %s105, %s111
          %s113 = smul.addr %s109, 128
          %s114 = scalar_lea.hbm %s0, %s113
          %s115 = sshll.u32 %s108, 4
          %s116 = int_to_ptr.vmem [resolvable:$true] %s115
          %121 = dma.hbm_to_vmem [thread:$0]  %s114, 512, %s116, %s105, 128, 128, 8
        $region20: #{tpu_custom_call.1} parent=15 // pred_fallthru
          _
      $region16: #{tpu_custom_call.1} parent=5 // pred_fallthru
        _
      %p122 = scmp.le.s32.totalorder 1, %s14
      %p123 = scmp.lt.s32.totalorder %s14, 3
      %p124 = pnand %p122, %p123
      %p125 = pneg %p124
      // Predicated region
      $region21: #{tpu_custom_call.1} parent=5 // pred_check
        _
      $region22: #{tpu_custom_call.1} parent=5 // pred_check_branch
        %127 = sbr.rel (%p124) target = $region24
      $region23: #{tpu_custom_call.1} parent=5 // pred_region
        %s128 = ssub.s32 %s14, 1
        %s129 = sand.u32 %s27, 1
        %s130 = scalar_lea.sflag [#allocation3], %s129
        %s131 = sand.u32 %s27, 1
        %s132 = smul.addr %s131, 32
        %s133 = scalar_lea.vmem [#allocation2], %s132
        // Predicated region
        $region25: #{tpu_custom_call.1} parent=23 // pred_check
          %p134 = pneg %p40
        $region26: #{tpu_custom_call.1} parent=23 // pred_check_branch
          %136 = sbr.rel (%p134) target = $region28
        $region27: #{tpu_custom_call.1} parent=23 // pred_region
          %137 = dma.done %s130, 512
        $region28: #{tpu_custom_call.1} parent=23 // pred_fallthru
          _
        %s138 = sand.u32 %s27, 1
        %s139 = scalar_lea.sflag [#allocation3], %s138
        %s140 = sand.u32 %s27, 1
        %s141 = smul.addr %s140, 32
        %s142 = scalar_lea.vmem [#allocation2], %s141
        %p143 = pneg %p40
        %p144 = pneg %p37
        %p145 = pneg %p61
        %p146 = pneg %p58
        %p147 = pneg %p82
        %p148 = pneg %p79
        %s149 = smul.u32 4, %s19
        %p150 = scmp.eq.s32.totalorder %s19, 0
        // Predicated region
        $region29: #{tpu_custom_call.1} parent=23 // pred_check
          %p151 = pneg %p150
        $region30: #{tpu_custom_call.1} parent=23 // pred_check_branch
          %153 = sbr.rel (%p151) target = $region32
        $region31: #{tpu_custom_call.1} parent=23 // pred_region
          %154 = vst [vmem:[#allocation5] sm:$0x1] 0.0
          %155 = vst [vmem:[#allocation6] sm:$0x1] 0.0
        $region32: #{tpu_custom_call.1} parent=23 // pred_fallthru
          _
        %v156 = vld [vmem:[%s133] sm:$0xff]
        %v157 = vld [vmem:[%s133 + $0x8] sm:$0xff]
        %v158 = vld [vmem:[%s133 + $0x10] sm:$0xff]
        %v159 = vld [vmem:[%s133 + $0x18] sm:$0xff]
        %v160 = vld [vmem:[#allocation5] sm:$0x1]
        %v161 = vadd.f32 %v156, %v157
        %v162 = vadd.f32 %v161, %v158
        %v163 = vadd.f32 %v162, %v159
        %v164 = vrot.slane %v163, 4
        %v165 = vadd.f32 %v163, %v164
        %v166 = vrot.slane %v165, 2
        %v167 = vadd.f32 %v165, %v166
        %v168 = vrot.slane %v167, 1
        %v169 = vadd.f32 %v167, %v168
        %v170 = vadd.f32 %v160, %v169
        %171 = vst [vmem:[#allocation5] sm:$0x1] %v170
        %v172 = vld [vmem:[#allocation6] sm:$0x1]
        %v173 = vmul.f32 %v156, %v156
        %v174 = vmul.f32 %v157, %v157
        %v175 = vmul.f32 %v158, %v158
        %v176 = vmul.f32 %v159, %v159
        %v177 = vadd.f32 %v173, %v174
        %v178 = vadd.f32 %v177, %v175
        %v179 = vadd.f32 %v178, %v176
        %v180 = vrot.slane %v179, 4
        %v181 = vadd.f32 %v179, %v180
        %v182 = vrot.slane %v181, 2
        %v183 = vadd.f32 %v181, %v182
        %v184 = vrot.slane %v183, 1
        %v185 = vadd.f32 %v183, %v184
        %v186 = vadd.f32 %v172, %v185
        %187 = vst [vmem:[#allocation6] sm:$0x1] %v186
        %p188 = scmp.eq.s32.totalorder %s19, 1
        // Predicated region
        $region33: #{tpu_custom_call.1} parent=23 // pred_check
          %p189 = pneg %p188
        $region34: #{tpu_custom_call.1} parent=23 // pred_check_branch
          %191 = sbr.rel (%p189) target = $region36
        $region35: #{tpu_custom_call.1} parent=23 // pred_region
          %v192 = vld [vmem:[#allocation5] sm:$0x1]
          %v193 = vld [vmem:[#allocation6] sm:$0x1]
          %v194 = vmul.f32 %v192, 0.015625
          %v195 = vmul.f32 %v193, 0.015625
          %v196 = vmul.f32 %v194, %v194
          %v197 = vsub.f32 %v195, %v196
          %198 = vst [vmem:[#allocation5] sm:$0x1] %v194
          %v199 = vadd.f32 %v197, 1e-05
          %v200 = vrsqrt.pop %v199
          %201 = vst [vmem:[#allocation6] sm:$0x1] %v200
        $region36: #{tpu_custom_call.1} parent=23 // pred_fallthru
          _
        // Predicated region
        $region37: #{tpu_custom_call.1} parent=23 // pred_check
          %p202 = pneg %p58
        $region38: #{tpu_custom_call.1} parent=23 // pred_check_branch
          %204 = sbr.rel (%p202) target = $region40
        $region39: #{tpu_custom_call.1} parent=23 // pred_region
          %s206 = ssub.s32 16, 16
          %207 = vsyncadd [#allocation4], %s206
          %s209 = sshll.u32 [#allocation5], 4
          %s210 = int_to_ptr.vmem [resolvable:$true] %s209
          %212 = dma.vmem_to_hbm [thread:$0]  %s210, 16, %s1, [#allocation4]
        $region40: #{tpu_custom_call.1} parent=23 // pred_fallthru
          _
        // Predicated region
        $region41: #{tpu_custom_call.1} parent=23 // pred_check
          %p213 = pneg %p79
        $region42: #{tpu_custom_call.1} parent=23 // pred_check_branch
          %215 = sbr.rel (%p213) target = $region44
        $region43: #{tpu_custom_call.1} parent=23 // pred_region
          %s217 = ssub.s32 16, 16
          %218 = vsyncadd [#allocation7], %s217
          %s220 = sshll.u32 [#allocation6], 4
          %s221 = int_to_ptr.vmem [resolvable:$true] %s220
          %223 = dma.vmem_to_hbm [thread:$0]  %s221, 16, %s2, [#allocation7]
        $region44: #{tpu_custom_call.1} parent=23 // pred_fallthru
          _
        // Predicated region
        $region45: #{tpu_custom_call.1} parent=23 // pred_check
          %p224 = pneg %p58
        $region46: #{tpu_custom_call.1} parent=23 // pred_check_branch
          %226 = sbr.rel (%p224) target = $region48
        $region47: #{tpu_custom_call.1} parent=23 // pred_region
          %227 = dma.done [#allocation4], 16
        $region48: #{tpu_custom_call.1} parent=23 // pred_fallthru
          _
        // Predicated region
        $region49: #{tpu_custom_call.1} parent=23 // pred_check
          %p228 = pneg %p79
        $region50: #{tpu_custom_call.1} parent=23 // pred_check_branch
          %230 = sbr.rel (%p228) target = $region52
        $region51: #{tpu_custom_call.1} parent=23 // pred_region
          %231 = dma.done [#allocation7], 16
        $region52: #{tpu_custom_call.1} parent=23 // pred_fallthru
          _
      $region24: #{tpu_custom_call.1} parent=5 // pred_fallthru
        _
      %p232 = scmp.le.s32.totalorder 2, %s14
      // Predicated region
      $region53: #{tpu_custom_call.1} parent=5 // pred_check
        %p233 = pneg %p232
      $region54: #{tpu_custom_call.1} parent=5 // pred_check_branch
        %235 = sbr.rel (%p233) target = $region56
      $region55: #{tpu_custom_call.1} parent=5 // pred_region
        %s236 = ssub.s32 %s14, 2
      $region56: #{tpu_custom_call.1} parent=5 // pred_fallthru
        _
    $region6: #{tpu_custom_call.1} parent=1 // loop_footer
      %s18 = sadd.s32 1, %s14
    $region7: #{tpu_custom_call.1} parent=1 // loop_footer_branch
      %13 = sbr.rel target = $region3
    $region8: #{tpu_custom_call.1} parent=1 // loop_exit
      _
    %237 = vsyncpa [#allocation3], 1
    %s238 = scalar_lea.sflag [#allocation3], 1
    %239 = vsyncpa %s238, 1
    %240 = vsyncpa [#allocation4], 1
    %s241 = scalar_lea.sflag [#allocation4], 1
    %242 = vsyncpa %s241, 1
    %243 = vsyncpa [#allocation7], 1

</llo_original>
